<compile_context>
chip_gen: v5e
topology: v5e:2x2
jax: 0.10.0
libtpu: 0.0.40
codegen_flags: <defaults>
</compile_context>

<pallas_src>
import functools

import jax
import jax.numpy as jnp
from jax import lax
from jax.experimental import pallas as pl
from jax.experimental.pallas import tpu as pltpu

LN_EPS = 1e-5   # PyTorch nn.LayerNorm default


def _round_up(x, m):
    return (x + m - 1) // m * m


def _pick_tile(batch, block_b):
    """Pick a batch tile (multiple of 8).  Prefer an even number of blocks for
    large batches so v7x's two TensorCores both get work on the parallel axis."""
    b8 = _round_up(batch, 8)
    if b8 <= block_b:
        if b8 >= 512:                       # big enough: split into 2 blocks
            return _round_up(pl.cdiv(b8, 2), 8)
        return b8                           # single block
    nb = pl.cdiv(b8, block_b)
    if nb % 2:                              # even block count for megacore
        nb += 1
    return _round_up(pl.cdiv(b8, nb), 8)


def _layernorm_onepass(x, gamma, beta):
    """Single-pass LayerNorm: both lane reductions issued together (overlap on
    the XLU), variance via E[x^2]-mu^2, gamma*rsqrt folded into one scale."""
    inv_n = 1.0 / x.shape[-1]
    s1 = jnp.sum(x, axis=-1, keepdims=True)
    s2 = jnp.sum(x * x, axis=-1, keepdims=True)
    mu = s1 * inv_n
    var = jnp.maximum(s2 * inv_n - mu * mu, 0.0)   # clamp cancellation noise
    scale = gamma * lax.rsqrt(var + LN_EPS)        # (tb, n)
    return x * scale + (beta - mu * scale)


def _layernorm_ref(x, gamma, beta):
    mu = jnp.mean(x, axis=-1, keepdims=True)
    xc = x - mu
    var = jnp.mean(xc * xc, axis=-1, keepdims=True)
    return xc * lax.rsqrt(var + LN_EPS) * gamma + beta


def critic_kernel(obs_ref, act_ref,
                  w1_ref, b1_ref, g1_ref, be1_ref,
                  w2_ref, b2_ref, g2_ref, be2_ref,
                  wa_ref, ba_ref,
                  wq_ref, bq_ref,
                  out_ref, *, matmul_dtype):
    # MXU matmuls (optionally bf16 inputs), f32 accumulation.
    def mm(x, w_ref):
        return jnp.dot(x.astype(matmul_dtype), w_ref[...].astype(matmul_dtype),
                       preferred_element_type=jnp.float32,
                       precision=lax.Precision.HIGHEST)

    # state branch: fc1 -> LayerNorm -> ReLU -> fc2 -> LayerNorm  (f32 epilogue)
    h1 = mm(obs_ref[...], w1_ref) + b1_ref[...]
    h1 = jnp.maximum(_layernorm_onepass(h1, g1_ref[...], be1_ref[...]), 0.0)
    state_value = _layernorm_onepass(mm(h1, w2_ref) + b2_ref[...],
                                     g2_ref[...], be2_ref[...])

    # action branch: Linear -> ReLU
    action_value = jnp.maximum(mm(act_ref[...], wa_ref) + ba_ref[...], 0.0)

    # fuse + final Q head.  A (tb, fc2) x (fc2, 1) matmul uses <1% of the MXU,
    # so use a VPU multiply + lane reduction instead (different VLIW slots).
    sav = jnp.maximum(state_value + action_value, 0.0)
    out_ref[...] = jnp.sum(sav * wq_ref[...], axis=-1, keepdims=True) + bq_ref[...]


@functools.partial(jax.jit, static_argnames=("block_b", "use_bf16_matmul"))
def critic_forward(obs, act, params, *, block_b=1024, use_bf16_matmul=False):
    w1, b1, g1, be1, w2, b2, g2, be2, wa, ba, wq, bq = params

    B, n_obs = obs.shape
    n_act = act.shape[1]
    fc2 = w2.shape[1]

    # Batch tiling only; feature dims stay unpadded (block last-dim == full dim
    # is legal, and it keeps input DMA and MXU K-depth at the true sizes).
    tb = _pick_tile(B, block_b)
    b_p = _round_up(B, tb)

    if b_p != B:  # only pad when the batch doesn't already match the tiling
        obs_in = jnp.pad(obs, ((0, b_p - B), (0, 0)))
        act_in = jnp.pad(act, ((0, b_p - B), (0, 0)))
    else:
        obs_in, act_in = obs, act

    wq_row = wq.reshape(1, fc2)   # Q head done as a VPU reduce in-kernel

    grid = (b_p // tb,)

    def batch_spec(feat):
        return pl.BlockSpec((tb, feat), lambda i: (i, 0))

    def const_spec(a):
        return pl.BlockSpec(a.shape, lambda i: (0,) * a.ndim)

    args = (obs_in, act_in,
            w1, b1, g1, be1,
            w2, b2, g2, be2,
            wa, ba,
            wq_row, bq)
    in_specs = [batch_spec(n_obs), batch_spec(n_act)] + \
               [const_spec(a) for a in args[2:]]

    kernel = functools.partial(
        critic_kernel,
        matmul_dtype=jnp.bfloat16 if use_bf16_matmul else jnp.float32)

    out = pl.pallas_call(
        kernel,
        out_shape=jax.ShapeDtypeStruct((b_p, 1), jnp.float32),
        grid=grid,
        in_specs=in_specs,
        out_specs=pl.BlockSpec((tb, 1), lambda i: (i, 0)),
        compiler_params=pltpu.CompilerParams(
            dimension_semantics=("parallel",),   # batch blocks shard across TCs
        ),
    )(*args)
    return out if b_p == B else out[:B]


def init_params(key, num_obs, num_act, fc1_size, fc2_size):
    """Deterministic init mirroring the PyTorch module's __init__.
    Weights stored as [in, out] (transposed vs PyTorch) so kernels do x @ W + b."""
    ks = jax.random.split(key, 8)
    f1 = 1.0 / jnp.sqrt(fc1_size)
    w1 = jax.random.uniform(ks[0], (num_obs, fc1_size), jnp.float32, -f1, f1)
    b1 = jax.random.uniform(ks[1], (1, fc1_size), jnp.float32, -f1, f1)
    g1 = jnp.ones((1, fc1_size), jnp.float32)
    be1 = jnp.zeros((1, fc1_size), jnp.float32)
    f2 = 1.0 / jnp.sqrt(fc2_size)
    w2 = jax.random.uniform(ks[2], (fc1_size, fc2_size), jnp.float32, -f2, f2)
    b2 = jax.random.uniform(ks[3], (1, fc2_size), jnp.float32, -f2, f2)
    g2 = jnp.ones((1, fc2_size), jnp.float32)
    be2 = jnp.zeros((1, fc2_size), jnp.float32)
    fa = 1.0 / jnp.sqrt(num_act)
    wa = jax.random.uniform(ks[4], (num_act, fc2_size), jnp.float32, -fa, fa)
    ba = jax.random.uniform(ks[5], (1, fc2_size), jnp.float32, -fa, fa)
    wq = jax.random.uniform(ks[6], (fc2_size, 1), jnp.float32, -0.003, 0.003)
    bq = jax.random.uniform(ks[7], (1, 1), jnp.float32, -0.003, 0.003)
    return (w1, b1, g1, be1, w2, b2, g2, be2, wa, ba, wq, bq)


def critic_reference(obs, act, params):
    """Pure-JAX reference for correctness checking (two-pass LayerNorm)."""
    w1, b1, g1, be1, w2, b2, g2, be2, wa, ba, wq, bq = params

    def dot(x, w):
        return jnp.dot(x, w, precision=lax.Precision.HIGHEST)

    h1 = jnp.maximum(_layernorm_ref(dot(obs, w1) + b1, g1, be1), 0.0)
    sv = _layernorm_ref(dot(h1, w2) + b2, g2, be2)
    av = jnp.maximum(dot(act, wa) + ba, 0.0)
    sav = jnp.maximum(sv + av, 0.0)
    return dot(sav, wq) + bq


if __name__ == "__main__":
    NUM_OBS = 16
    NUM_ACT = 8
    FC1 = 128
    FC2 = 128

    key = jax.random.PRNGKey(0)
    k_obs, k_act, k_par = jax.random.split(key, 3)
    params = init_params(k_par, NUM_OBS, NUM_ACT, FC1, FC2)

    # Small deployment-style batch (single grid block, no padding, no slicing).
    B = 8
    obs = jax.random.normal(k_obs, (B, NUM_OBS), jnp.float32)
    act = jax.random.normal(k_act, (B, NUM_ACT), jnp.float32)
    out = jax.block_until_ready(critic_forward(obs, act, params))
    ref = critic_reference(obs, act, params)
    assert out.shape == (B, 1), out.shape
    assert jnp.allclose(out, ref, atol=1e-4, rtol=1e-4)

    # Ragged batch: exercises the pad + slice fallback path.
    B1 = 13
    obs1 = jax.random.normal(k_obs, (B1, NUM_OBS), jnp.float32)
    act1 = jax.random.normal(k_act, (B1, NUM_ACT), jnp.float32)
    out1 = jax.block_until_ready(critic_forward(obs1, act1, params))
    ref1 = critic_reference(obs1, act1, params)
    assert out1.shape == (B1, 1), out1.shape
    assert jnp.allclose(out1, ref1, atol=1e-4, rtol=1e-4)

    # Training-style batch: two even batch blocks -> pipelined, both-TC path.
    B2 = 512
    obs2 = jax.random.normal(k_obs, (B2, NUM_OBS), jnp.float32)
    act2 = jax.random.normal(k_act, (B2, NUM_ACT), jnp.float32)
    out2 = jax.block_until_ready(critic_forward(obs2, act2, params))
    ref2 = critic_reference(obs2, act2, params)
    assert out2.shape == (B2, 1), out2.shape
    assert jnp.allclose(out2, ref2, atol=1e-4, rtol=1e-4)

    print("KERNEL_OK")
</pallas_src>

<mosaic_0001>
module attributes {stable_mosaic.version = 11 : i64} {
  func.func @critic_kernel(%arg0: i32, %arg1: memref<8x16xf32, #tpu.memory_space<vmem>>, %arg2: memref<8x8xf32, #tpu.memory_space<vmem>>, %arg3: memref<16x128xf32, #tpu.memory_space<vmem>>, %arg4: memref<1x128xf32, #tpu.memory_space<vmem>>, %arg5: memref<1x128xf32, #tpu.memory_space<vmem>>, %arg6: memref<1x128xf32, #tpu.memory_space<vmem>>, %arg7: memref<128x128xf32, #tpu.memory_space<vmem>>, %arg8: memref<1x128xf32, #tpu.memory_space<vmem>>, %arg9: memref<1x128xf32, #tpu.memory_space<vmem>>, %arg10: memref<1x128xf32, #tpu.memory_space<vmem>>, %arg11: memref<8x128xf32, #tpu.memory_space<vmem>>, %arg12: memref<1x128xf32, #tpu.memory_space<vmem>>, %arg13: memref<1x128xf32, #tpu.memory_space<vmem>>, %arg14: memref<1x1xf32, #tpu.memory_space<vmem>>, %arg15: memref<8x1xf32, #tpu.memory_space<vmem>>) attributes {dimension_semantics = [#tpu.dimension_semantics<parallel>], iteration_bounds = array<i64: 1>, scalar_prefetch = 0 : i64, scratch_operands = 0 : i64, tpu.core_type = #tpu.core_type<tc>, window_params = [{transform_indices = @transform_0, window_bounds = array<i64: 8, 16>}, {transform_indices = @transform_1, window_bounds = array<i64: 8, 8>}, {pipeline_mode = #tpu.pipeline_mode<synchronous>, transform_indices = @transform_2, window_bounds = array<i64: 16, 128>}, {pipeline_mode = #tpu.pipeline_mode<synchronous>, transform_indices = @transform_3, window_bounds = array<i64: 1, 128>}, {pipeline_mode = #tpu.pipeline_mode<synchronous>, transform_indices = @transform_4, window_bounds = array<i64: 1, 128>}, {pipeline_mode = #tpu.pipeline_mode<synchronous>, transform_indices = @transform_5, window_bounds = array<i64: 1, 128>}, {pipeline_mode = #tpu.pipeline_mode<synchronous>, transform_indices = @transform_6, window_bounds = array<i64: 128, 128>}, {pipeline_mode = #tpu.pipeline_mode<synchronous>, transform_indices = @transform_7, window_bounds = array<i64: 1, 128>}, {pipeline_mode = #tpu.pipeline_mode<synchronous>, transform_indices = @transform_8, window_bounds = array<i64: 1, 128>}, {pipeline_mode = #tpu.pipeline_mode<synchronous>, transform_indices = @transform_9, window_bounds = array<i64: 1, 128>}, {pipeline_mode = #tpu.pipeline_mode<synchronous>, transform_indices = @transform_10, window_bounds = array<i64: 8, 128>}, {pipeline_mode = #tpu.pipeline_mode<synchronous>, transform_indices = @transform_11, window_bounds = array<i64: 1, 128>}, {pipeline_mode = #tpu.pipeline_mode<synchronous>, transform_indices = @transform_12, window_bounds = array<i64: 1, 128>}, {pipeline_mode = #tpu.pipeline_mode<synchronous>, transform_indices = @transform_13, window_bounds = array<i64: 1, 1>}, {transform_indices = @transform_14, window_bounds = array<i64: 8, 1>}]} {
    %c0 = arith.constant 0 : index
    %c0_0 = arith.constant 0 : index
    %0 = vector.load %arg1[%c0, %c0_0] : memref<8x16xf32, #tpu.memory_space<vmem>>, vector<8x16xf32>
    %c0_1 = arith.constant 0 : index
    %c0_2 = arith.constant 0 : index
    %1 = vector.load %arg3[%c0_1, %c0_2] : memref<16x128xf32, #tpu.memory_space<vmem>>, vector<16x128xf32>
    %cst = arith.constant dense<0.000000e+00> : vector<8x128xf32>
    %2 = tpu.matmul %0, %1, %cst {dimension_numbers = #tpu.dot_dimension_numbers<[1], [0], [0], [1], [0, 0, 1, 1], [], []>, precision = #tpu.contract_precision<fp32>} : vector<8x16xf32>, vector<16x128xf32>, vector<8x128xf32> -> vector<8x128xf32>
    %c0_3 = arith.constant 0 : index
    %c0_4 = arith.constant 0 : index
    %3 = vector.load %arg4[%c0_3, %c0_4] : memref<1x128xf32, #tpu.memory_space<vmem>>, vector<1x128xf32>
    %4 = vector.broadcast %3 : vector<1x128xf32> to vector<8x128xf32>
    %5 = arith.addf %2, %4 : vector<8x128xf32>
    %c0_5 = arith.constant 0 : index
    %c0_6 = arith.constant 0 : index
    %6 = vector.load %arg5[%c0_5, %c0_6] : memref<1x128xf32, #tpu.memory_space<vmem>>, vector<1x128xf32>
    %c0_7 = arith.constant 0 : index
    %c0_8 = arith.constant 0 : index
    %7 = vector.load %arg6[%c0_7, %c0_8] : memref<1x128xf32, #tpu.memory_space<vmem>>, vector<1x128xf32>
    %cst_9 = arith.constant dense<0.000000e+00> : vector<8xf32>
    %8 = vector.multi_reduction <add>, %5, %cst_9 [1] : vector<8x128xf32> to vector<8xf32>
    %9 = vector.shape_cast %8 : vector<8xf32> to vector<8x1xf32>
    %10 = arith.mulf %5, %5 : vector<8x128xf32>
    %cst_10 = arith.constant dense<0.000000e+00> : vector<8xf32>
    %11 = vector.multi_reduction <add>, %10, %cst_10 [1] : vector<8x128xf32> to vector<8xf32>
    %12 = vector.shape_cast %11 : vector<8xf32> to vector<8x1xf32>
    %cst_11 = arith.constant 7.812500e-03 : f32
    %13 = vector.broadcast %cst_11 : f32 to vector<8x1xf32>
    %14 = arith.mulf %9, %13 : vector<8x1xf32>
    %cst_12 = arith.constant 7.812500e-03 : f32
    %15 = vector.broadcast %cst_12 : f32 to vector<8x1xf32>
    %16 = arith.mulf %12, %15 : vector<8x1xf32>
    %17 = arith.mulf %14, %14 : vector<8x1xf32>
    %18 = arith.subf %16, %17 : vector<8x1xf32>
    %cst_13 = arith.constant 0.000000e+00 : f32
    %19 = vector.broadcast %cst_13 : f32 to vector<8x1xf32>
    %20 = arith.maximumf %18, %19 : vector<8x1xf32>
    %cst_14 = arith.constant 9.99999974E-6 : f32
    %21 = vector.broadcast %cst_14 : f32 to vector<8x1xf32>
    %22 = arith.addf %20, %21 : vector<8x1xf32>
    %23 = math.rsqrt %22 : vector<8x1xf32>
    %24 = vector.broadcast %6 : vector<1x128xf32> to vector<8x128xf32>
    %25 = vector.broadcast %23 : vector<8x1xf32> to vector<8x128xf32>
    %26 = arith.mulf %24, %25 : vector<8x128xf32>
    %27 = arith.mulf %5, %26 : vector<8x128xf32>
    %28 = vector.broadcast %14 : vector<8x1xf32> to vector<8x128xf32>
    %29 = arith.mulf %28, %26 : vector<8x128xf32>
    %30 = vector.broadcast %7 : vector<1x128xf32> to vector<8x128xf32>
    %31 = arith.subf %30, %29 : vector<8x128xf32>
    %32 = arith.addf %27, %31 : vector<8x128xf32>
    %cst_15 = arith.constant 0.000000e+00 : f32
    %33 = vector.broadcast %cst_15 : f32 to vector<8x128xf32>
    %34 = arith.maximumf %32, %33 : vector<8x128xf32>
    %c0_16 = arith.constant 0 : index
    %c0_17 = arith.constant 0 : index
    %35 = vector.load %arg7[%c0_16, %c0_17] : memref<128x128xf32, #tpu.memory_space<vmem>>, vector<128x128xf32>
    %cst_18 = arith.constant dense<0.000000e+00> : vector<8x128xf32>
    %36 = tpu.matmul %34, %35, %cst_18 {dimension_numbers = #tpu.dot_dimension_numbers<[1], [0], [0], [1], [0, 0, 1, 1], [], []>, precision = #tpu.contract_precision<fp32>} : vector<8x128xf32>, vector<128x128xf32>, vector<8x128xf32> -> vector<8x128xf32>
    %c0_19 = arith.constant 0 : index
    %c0_20 = arith.constant 0 : index
    %37 = vector.load %arg8[%c0_19, %c0_20] : memref<1x128xf32, #tpu.memory_space<vmem>>, vector<1x128xf32>
    %38 = vector.broadcast %37 : vector<1x128xf32> to vector<8x128xf32>
    %39 = arith.addf %36, %38 : vector<8x128xf32>
    %c0_21 = arith.constant 0 : index
    %c0_22 = arith.constant 0 : index
    %40 = vector.load %arg9[%c0_21, %c0_22] : memref<1x128xf32, #tpu.memory_space<vmem>>, vector<1x128xf32>
    %c0_23 = arith.constant 0 : index
    %c0_24 = arith.constant 0 : index
    %41 = vector.load %arg10[%c0_23, %c0_24] : memref<1x128xf32, #tpu.memory_space<vmem>>, vector<1x128xf32>
    %cst_25 = arith.constant dense<0.000000e+00> : vector<8xf32>
    %42 = vector.multi_reduction <add>, %39, %cst_25 [1] : vector<8x128xf32> to vector<8xf32>
    %43 = vector.shape_cast %42 : vector<8xf32> to vector<8x1xf32>
    %44 = arith.mulf %39, %39 : vector<8x128xf32>
    %cst_26 = arith.constant dense<0.000000e+00> : vector<8xf32>
    %45 = vector.multi_reduction <add>, %44, %cst_26 [1] : vector<8x128xf32> to vector<8xf32>
    %46 = vector.shape_cast %45 : vector<8xf32> to vector<8x1xf32>
    %cst_27 = arith.constant 7.812500e-03 : f32
    %47 = vector.broadcast %cst_27 : f32 to vector<8x1xf32>
    %48 = arith.mulf %43, %47 : vector<8x1xf32>
    %cst_28 = arith.constant 7.812500e-03 : f32
    %49 = vector.broadcast %cst_28 : f32 to vector<8x1xf32>
    %50 = arith.mulf %46, %49 : vector<8x1xf32>
    %51 = arith.mulf %48, %48 : vector<8x1xf32>
    %52 = arith.subf %50, %51 : vector<8x1xf32>
    %cst_29 = arith.constant 0.000000e+00 : f32
    %53 = vector.broadcast %cst_29 : f32 to vector<8x1xf32>
    %54 = arith.maximumf %52, %53 : vector<8x1xf32>
    %cst_30 = arith.constant 9.99999974E-6 : f32
    %55 = vector.broadcast %cst_30 : f32 to vector<8x1xf32>
    %56 = arith.addf %54, %55 : vector<8x1xf32>
    %57 = math.rsqrt %56 : vector<8x1xf32>
    %58 = vector.broadcast %40 : vector<1x128xf32> to vector<8x128xf32>
    %59 = vector.broadcast %57 : vector<8x1xf32> to vector<8x128xf32>
    %60 = arith.mulf %58, %59 : vector<8x128xf32>
    %61 = arith.mulf %39, %60 : vector<8x128xf32>
    %62 = vector.broadcast %48 : vector<8x1xf32> to vector<8x128xf32>
    %63 = arith.mulf %62, %60 : vector<8x128xf32>
    %64 = vector.broadcast %41 : vector<1x128xf32> to vector<8x128xf32>
    %65 = arith.subf %64, %63 : vector<8x128xf32>
    %66 = arith.addf %61, %65 : vector<8x128xf32>
    %c0_31 = arith.constant 0 : index
    %c0_32 = arith.constant 0 : index
    %67 = vector.load %arg2[%c0_31, %c0_32] : memref<8x8xf32, #tpu.memory_space<vmem>>, vector<8x8xf32>
    %c0_33 = arith.constant 0 : index
    %c0_34 = arith.constant 0 : index
    %68 = vector.load %arg11[%c0_33, %c0_34] : memref<8x128xf32, #tpu.memory_space<vmem>>, vector<8x128xf32>
    %cst_35 = arith.constant dense<0.000000e+00> : vector<8x128xf32>
    %69 = tpu.matmul %67, %68, %cst_35 {dimension_numbers = #tpu.dot_dimension_numbers<[1], [0], [0], [1], [0, 0, 1, 1], [], []>, precision = #tpu.contract_precision<fp32>} : vector<8x8xf32>, vector<8x128xf32>, vector<8x128xf32> -> vector<8x128xf32>
    %c0_36 = arith.constant 0 : index
    %c0_37 = arith.constant 0 : index
    %70 = vector.load %arg12[%c0_36, %c0_37] : memref<1x128xf32, #tpu.memory_space<vmem>>, vector<1x128xf32>
    %71 = vector.broadcast %70 : vector<1x128xf32> to vector<8x128xf32>
    %72 = arith.addf %69, %71 : vector<8x128xf32>
    %cst_38 = arith.constant 0.000000e+00 : f32
    %73 = vector.broadcast %cst_38 : f32 to vector<8x128xf32>
    %74 = arith.maximumf %72, %73 : vector<8x128xf32>
    %75 = arith.addf %66, %74 : vector<8x128xf32>
    %cst_39 = arith.constant 0.000000e+00 : f32
    %76 = vector.broadcast %cst_39 : f32 to vector<8x128xf32>
    %77 = arith.maximumf %75, %76 : vector<8x128xf32>
    %c0_40 = arith.constant 0 : index
    %c0_41 = arith.constant 0 : index
    %78 = vector.load %arg13[%c0_40, %c0_41] : memref<1x128xf32, #tpu.memory_space<vmem>>, vector<1x128xf32>
    %79 = vector.broadcast %78 : vector<1x128xf32> to vector<8x128xf32>
    %80 = arith.mulf %77, %79 : vector<8x128xf32>
    %cst_42 = arith.constant dense<0.000000e+00> : vector<8xf32>
    %81 = vector.multi_reduction <add>, %80, %cst_42 [1] : vector<8x128xf32> to vector<8xf32>
    %82 = vector.shape_cast %81 : vector<8xf32> to vector<8x1xf32>
    %c0_43 = arith.constant 0 : index
    %c0_44 = arith.constant 0 : index
    %83 = vector.load %arg14[%c0_43, %c0_44] : memref<1x1xf32, #tpu.memory_space<vmem>>, vector<1x1xf32>
    %84 = vector.broadcast %83 : vector<1x1xf32> to vector<8x1xf32>
    %85 = arith.addf %82, %84 : vector<8x1xf32>
    %c0_45 = arith.constant 0 : index
    %c0_46 = arith.constant 0 : index
    %86 = vector.load %arg15[%c0_45, %c0_46] : memref<8x1xf32, #tpu.memory_space<vmem>>, vector<8x1xf32>
    tpu.vector_store %arg15[%c0_45, %c0_46], %85 {strides = array<i32>} : memref<8x1xf32, #tpu.memory_space<vmem>>, vector<8x1xf32>,
    return
  }
  func.func @transform_0(%arg0: i32) -> (i32, i32) {
    %c0_i32 = arith.constant 0 : i32
    %c0_i32_0 = arith.constant 0 : i32
    return %arg0, %c0_i32 : i32, i32
  }
  func.func @transform_1(%arg0: i32) -> (i32, i32) {
    %c0_i32 = arith.constant 0 : i32
    %c0_i32_0 = arith.constant 0 : i32
    return %arg0, %c0_i32 : i32, i32
  }
  func.func @transform_2(%arg0: i32) -> (i32, i32) {
    %c0_i32 = arith.constant 0 : i32
    %c0_i32_0 = arith.constant 0 : i32
    %c0_i32_1 = arith.constant 0 : i32
    return %c0_i32, %c0_i32_0 : i32, i32
  }
  func.func @transform_3(%arg0: i32) -> (i32, i32) {
    %c0_i32 = arith.constant 0 : i32
    %c0_i32_0 = arith.constant 0 : i32
    %c0_i32_1 = arith.constant 0 : i32
    return %c0_i32, %c0_i32_0 : i32, i32
  }
  func.func @transform_4(%arg0: i32) -> (i32, i32) {
    %c0_i32 = arith.constant 0 : i32
    %c0_i32_0 = arith.constant 0 : i32
    %c0_i32_1 = arith.constant 0 : i32
    return %c0_i32, %c0_i32_0 : i32, i32
  }
  func.func @transform_5(%arg0: i32) -> (i32, i32) {
    %c0_i32 = arith.constant 0 : i32
    %c0_i32_0 = arith.constant 0 : i32
    %c0_i32_1 = arith.constant 0 : i32
    return %c0_i32, %c0_i32_0 : i32, i32
  }
  func.func @transform_6(%arg0: i32) -> (i32, i32) {
    %c0_i32 = arith.constant 0 : i32
    %c0_i32_0 = arith.constant 0 : i32
    %c0_i32_1 = arith.constant 0 : i32
    return %c0_i32, %c0_i32_0 : i32, i32
  }
  func.func @transform_7(%arg0: i32) -> (i32, i32) {
    %c0_i32 = arith.constant 0 : i32
    %c0_i32_0 = arith.constant 0 : i32
    %c0_i32_1 = arith.constant 0 : i32
    return %c0_i32, %c0_i32_0 : i32, i32
  }
  func.func @transform_8(%arg0: i32) -> (i32, i32) {
    %c0_i32 = arith.constant 0 : i32
    %c0_i32_0 = arith.constant 0 : i32
    %c0_i32_1 = arith.constant 0 : i32
    return %c0_i32, %c0_i32_0 : i32, i32
  }
  func.func @transform_9(%arg0: i32) -> (i32, i32) {
    %c0_i32 = arith.constant 0 : i32
    %c0_i32_0 = arith.constant 0 : i32
    %c0_i32_1 = arith.constant 0 : i32
    return %c0_i32, %c0_i32_0 : i32, i32
  }
  func.func @transform_10(%arg0: i32) -> (i32, i32) {
    %c0_i32 = arith.constant 0 : i32
    %c0_i32_0 = arith.constant 0 : i32
    %c0_i32_1 = arith.constant 0 : i32
    return %c0_i32, %c0_i32_0 : i32, i32
  }
  func.func @transform_11(%arg0: i32) -> (i32, i32) {
    %c0_i32 = arith.constant 0 : i32
    %c0_i32_0 = arith.constant 0 : i32
    %c0_i32_1 = arith.constant 0 : i32
    return %c0_i32, %c0_i32_0 : i32, i32
  }
  func.func @transform_12(%arg0: i32) -> (i32, i32) {
    %c0_i32 = arith.constant 0 : i32
    %c0_i32_0 = arith.constant 0 : i32
    %c0_i32_1 = arith.constant 0 : i32
    return %c0_i32, %c0_i32_0 : i32, i32
  }
  func.func @transform_13(%arg0: i32) -> (i32, i32) {
    %c0_i32 = arith.constant 0 : i32
    %c0_i32_0 = arith.constant 0 : i32
    %c0_i32_1 = arith.constant 0 : i32
    return %c0_i32, %c0_i32_0 : i32, i32
  }
  func.func @transform_14(%arg0: i32) -> (i32, i32) {
    %c0_i32 = arith.constant 0 : i32
    %c0_i32_0 = arith.constant 0 : i32
    return %arg0, %c0_i32 : i32, i32
  }
}

</mosaic_0001>

<llo_original>
// kernel: critic_forward.1
$region0: #{critic_forward.1}
  #allocation0 [shape = 'u32[]', space=smem, size = 0x4, offset = 0x4, fixed_abs, tag = 'smem constant byte address 0x4 - core index']
  #allocation1 [shape = 'u32[72,128]{1,0:T(1,128)}', space=vmem, size = 0x9000, scoped, tag = 'internal scratch']
  #allocation2 [shape = 'f32[1,1]{1,0:T(1,128)S(1)}', space=vmem, size = 0x200, scoped, tag = 'scoped memory for critic_forward.1']
  %s0 = inlined_call_operand.hbm [shape: f32[8,16], index: 0, kind: input, shape index: {}]
  %s1 = inlined_call_operand.hbm [shape: f32[8,8], index: 1, kind: input, shape index: {}]
  %s2 = inlined_call_operand.hbm [shape: f32[16,128], index: 2, kind: input, shape index: {}]
  %s3 = inlined_call_operand.vmem [shape: f32[1,128], index: 3, kind: input, shape index: {}]
  %s4 = inlined_call_operand.vmem [shape: f32[1,128], index: 4, kind: input, shape index: {}]
  %s5 = inlined_call_operand.vmem [shape: f32[1,128], index: 5, kind: input, shape index: {}]
  %s6 = inlined_call_operand.hbm [shape: f32[128,128], index: 6, kind: input, shape index: {}]
  %s7 = inlined_call_operand.vmem [shape: f32[1,128], index: 7, kind: input, shape index: {}]
  %s8 = inlined_call_operand.hbm [shape: f32[1,128], index: 8, kind: input, shape index: {}]
  %s9 = inlined_call_operand.hbm [shape: f32[1,128], index: 9, kind: input, shape index: {}]
  %s10 = inlined_call_operand.vmem [shape: f32[8,128], index: 10, kind: input, shape index: {}]
  %s11 = inlined_call_operand.vmem [shape: f32[1,128], index: 11, kind: input, shape index: {}]
  %s12 = inlined_call_operand.vmem [shape: f32[1,128], index: 12, kind: input, shape index: {}]
  %s13 = inlined_call_operand.<no memory space> [shape: f32[1,1], index: 13, kind: input, shape index: {}]
  %s14 = inlined_call_operand.vmem [shape: f32[8,1], index: 14, kind: output, shape index: {}]
  %s15 = sld [smem:[#allocation0]]
  $region90: #{critic_forward.1} parent=0
    _
  %s17 = ssub.s32 1, %s15
  %s18 = scalar_select 0, %s17, %s15
  %v19 = vstv %s13
  %20 = vst [vmem:[#allocation2] sm:$0x1] %v19
  $region1: #{critic_forward.1} parent=0
    #allocation3 [shape = 'u8[4096]{0}', space=vmem, size = 0x1000, scoped, tag = 'input window, operand 0, single buffered']
    #allocation4 [shape = 's32[1]{0}', space=sflag, size = 0x4, scoped, tag = 'scoped memory for critic_forward.1']
    #allocation5 [shape = 'u8[4096]{0}', space=vmem, size = 0x1000, scoped, tag = 'input window, operand 1, single buffered']
    #allocation6 [shape = 's32[1]{0}', space=sflag, size = 0x4, scoped, tag = 'scoped memory for critic_forward.1']
    #allocation7 [shape = 'u8[8192]{0}', space=vmem, size = 0x2000, scoped, tag = 'input window, operand 2, single buffered']
    #allocation8 [shape = 'u8[65536]{0}', space=vmem, size = 0x10000, scoped, tag = 'input window, operand 6, single buffered']
    #allocation9 [shape = 's32[1]{0}', space=sflag, size = 0x4, scoped, tag = 'scoped memory for critic_forward.1']
    #allocation10 [shape = 'u8[512]{0}', space=vmem, size = 0x400, scoped, tag = 'input window, operand 8, single buffered']
    #allocation11 [shape = 'u8[512]{0}', space=vmem, size = 0x400, scoped, tag = 'input window, operand 9, single buffered']
    #allocation12 [shape = 's32[1]{0}', space=sflag, size = 0x4, scoped, tag = 'scoped memory for critic_forward.1']
    %21 = vsyncpa [#allocation4], 0
    %22 = vsyncpa [#allocation6], 0
    %23 = vsyncpa [#allocation9], 0
    %24 = vsyncpa [#allocation12], 0
    // Predicated region
    $region2: #{critic_forward.1} parent=1 // pred_check
      _
    $region3: #{critic_forward.1} parent=1 // pred_check_branch
      %26 = sbr.rel (0) target = $region5
    $region4: #{critic_forward.1} parent=1 // pred_region
      %28 = vsyncadd [#allocation4], 0
      %s30 = sshll.u32 %s0, 4
      %s31 = int_to_ptr.hbm [resolvable:$true] %s30
      %s32 = sshll.u32 [#allocation3], 4
      %s33 = int_to_ptr.vmem [resolvable:$true] %s32
      %35 = dma.hbm_to_vmem [thread:$0]  %s31, 128, %s33, [#allocation4]
    $region5: #{critic_forward.1} parent=1 // pred_fallthru
      _
    // Predicated region
    $region6: #{critic_forward.1} parent=1 // pred_check
      _
    $region7: #{critic_forward.1} parent=1 // pred_check_branch
      %37 = sbr.rel (0) target = $region9
    $region8: #{critic_forward.1} parent=1 // pred_region
      %39 = vsyncadd [#allocation6], 0
      %s41 = sshll.u32 %s1, 4
      %s42 = int_to_ptr.hbm [resolvable:$true] %s41
      %s43 = sshll.u32 [#allocation5], 4
      %s44 = int_to_ptr.vmem [resolvable:$true] %s43
      %46 = dma.hbm_to_vmem [thread:$0]  %s42, 128, %s44, [#allocation6]
    $region9: #{critic_forward.1} parent=1 // pred_fallthru
      _
    // Predicated region
    $region10: #{critic_forward.1} parent=1 // pred_check
      _
    $region11: #{critic_forward.1} parent=1 // pred_check_branch
      %48 = sbr.rel (0) target = $region13
    $region12: #{critic_forward.1} parent=1 // pred_region
      %50 = vsyncadd [#allocation6], 0
      %s51 = sshll.u32 %s2, 4
      %s52 = int_to_ptr.hbm [resolvable:$true] %s51
      %s53 = sshll.u32 [#allocation7], 4
      %s54 = int_to_ptr.vmem [resolvable:$true] %s53
      %59 = dma.hbm_to_vmem [thread:$0]  %s52, 256, %s54, [#allocation6], 128, 128, 8
    $region13: #{critic_forward.1} parent=1 // pred_fallthru
      _
    // Predicated region
    $region14: #{critic_forward.1} parent=1 // pred_check
      _
    $region15: #{critic_forward.1} parent=1 // pred_check_branch
      %61 = sbr.rel (0) target = $region17
    $region16: #{critic_forward.1} parent=1 // pred_region
      _
    $region17: #{critic_forward.1} parent=1 // pred_fallthru
      _
    // Predicated region
    $region18: #{critic_forward.1} parent=1 // pred_check
      _
    $region19: #{critic_forward.1} parent=1 // pred_check_branch
      %63 = sbr.rel (0) target = $region21
    $region20: #{critic_forward.1} parent=1 // pred_region
      _
    $region21: #{critic_forward.1} parent=1 // pred_fallthru
      _
    // Predicated region
    $region22: #{critic_forward.1} parent=1 // pred_check
      _
    $region23: #{critic_forward.1} parent=1 // pred_check_branch
      %65 = sbr.rel (0) target = $region25
    $region24: #{critic_forward.1} parent=1 // pred_region
      _
    $region25: #{critic_forward.1} parent=1 // pred_fallthru
      _
    // Predicated region
    $region26: #{critic_forward.1} parent=1 // pred_check
      _
    $region27: #{critic_forward.1} parent=1 // pred_check_branch
      %67 = sbr.rel (0) target = $region29
    $region28: #{critic_forward.1} parent=1 // pred_region
      %69 = vsyncadd [#allocation9], 0
      %s70 = sshll.u32 %s6, 4
      %s71 = int_to_ptr.hbm [resolvable:$true] %s70
      %s72 = sshll.u32 [#allocation8], 4
      %s73 = int_to_ptr.vmem [resolvable:$true] %s72
      %78 = dma.hbm_to_vmem [thread:$0]  %s71, 2048, %s73, [#allocation9], 128, 128, 8
    $region29: #{critic_forward.1} parent=1 // pred_fallthru
      _
    // Predicated region
    $region30: #{critic_forward.1} parent=1 // pred_check
      _
    $region31: #{critic_forward.1} parent=1 // pred_check_branch
      %80 = sbr.rel (0) target = $region33
    $region32: #{critic_forward.1} parent=1 // pred_region
      _
    $region33: #{critic_forward.1} parent=1 // pred_fallthru
      _
    // Predicated region
    $region34: #{critic_forward.1} parent=1 // pred_check
      _
    $region35: #{critic_forward.1} parent=1 // pred_check_branch
      %82 = sbr.rel (0) target = $region37
    $region36: #{critic_forward.1} parent=1 // pred_region
      %84 = vsyncadd [#allocation9], 0
      %s86 = sshll.u32 %s8, 4
      %s87 = int_to_ptr.hbm [resolvable:$true] %s86
      %s88 = sshll.u32 [#allocation10], 4
      %s89 = int_to_ptr.vmem [resolvable:$true] %s88
      %91 = dma.hbm_to_vmem [thread:$0]  %s87, 16, %s89, [#allocation9]
    $region37: #{critic_forward.1} parent=1 // pred_fallthru
      _
    // Predicated region
    $region38: #{critic_forward.1} parent=1 // pred_check
      _
    $region39: #{critic_forward.1} parent=1 // pred_check_branch
      %93 = sbr.rel (0) target = $region41
    $region40: #{critic_forward.1} parent=1 // pred_region
      %95 = vsyncadd [#allocation12], 0
      %s97 = sshll.u32 %s9, 4
      %s98 = int_to_ptr.hbm [resolvable:$true] %s97
      %s99 = sshll.u32 [#allocation11], 4
      %s100 = int_to_ptr.vmem [resolvable:$true] %s99
      %102 = dma.hbm_to_vmem [thread:$0]  %s98, 16, %s100, [#allocation12]
    $region41: #{critic_forward.1} parent=1 // pred_fallthru
      _
    // Predicated region
    $region42: #{critic_forward.1} parent=1 // pred_check
      _
    $region43: #{critic_forward.1} parent=1 // pred_check_branch
      %104 = sbr.rel (0) target = $region45
    $region44: #{critic_forward.1} parent=1 // pred_region
      _
    $region45: #{critic_forward.1} parent=1 // pred_fallthru
      _
    // Predicated region
    $region46: #{critic_forward.1} parent=1 // pred_check
      _
    $region47: #{critic_forward.1} parent=1 // pred_check_branch
      %106 = sbr.rel (0) target = $region49
    $region48: #{critic_forward.1} parent=1 // pred_region
      _
    $region49: #{critic_forward.1} parent=1 // pred_fallthru
      _
    // Predicated region
    $region50: #{critic_forward.1} parent=1 // pred_check
      _
    $region51: #{critic_forward.1} parent=1 // pred_check_branch
      %108 = sbr.rel (0) target = $region53
    $region52: #{critic_forward.1} parent=1 // pred_region
      _
    $region53: #{critic_forward.1} parent=1 // pred_fallthru
      _
    // Predicated region
    $region54: #{critic_forward.1} parent=1 // pred_check
      _
    $region55: #{critic_forward.1} parent=1 // pred_check_branch
      %110 = sbr.rel (0) target = $region57
    $region56: #{critic_forward.1} parent=1 // pred_region
      _
    $region57: #{critic_forward.1} parent=1 // pred_fallthru
      _
    // Predicated region
    $region58: #{critic_forward.1} parent=1 // pred_check
      _
    $region59: #{critic_forward.1} parent=1 // pred_check_branch
      %112 = sbr.rel (0) target = $region61
    $region60: #{critic_forward.1} parent=1 // pred_region
      %114 = dma.done [#allocation4], 128
    $region61: #{critic_forward.1} parent=1 // pred_fallthru
      _
    // Predicated region
    $region62: #{critic_forward.1} parent=1 // pred_check
      _
    $region63: #{critic_forward.1} parent=1 // pred_check_branch
      %116 = sbr.rel (0) target = $region65
    $region64: #{critic_forward.1} parent=1 // pred_region
      %118 = dma.done [#allocation6], 128
    $region65: #{critic_forward.1} parent=1 // pred_fallthru
      _
    // Predicated region
    $region66: #{critic_forward.1} parent=1 // pred_check
      _
    $region67: #{critic_forward.1} parent=1 // pred_check_branch
      %120 = sbr.rel (0) target = $region69
    $region68: #{critic_forward.1} parent=1 // pred_region
      %122 = dma.done [#allocation6], 256
    $region69: #{critic_forward.1} parent=1 // pred_fallthru
      _
    // Predicated region
    $region70: #{critic_forward.1} parent=1 // pred_check
      _
    $region71: #{critic_forward.1} parent=1 // pred_check_branch
      %124 = sbr.rel (0) target = $region73
    $region72: #{critic_forward.1} parent=1 // pred_region
      %126 = dma.done [#allocation9], 2048
    $region73: #{critic_forward.1} parent=1 // pred_fallthru
      _
    // Predicated region
    $region74: #{critic_forward.1} parent=1 // pred_check
      _
    $region75: #{critic_forward.1} parent=1 // pred_check_branch
      %128 = sbr.rel (0) target = $region77
    $region76: #{critic_forward.1} parent=1 // pred_region
      %130 = dma.done [#allocation9], 16
    $region77: #{critic_forward.1} parent=1 // pred_fallthru
      _
    // Predicated region
    $region78: #{critic_forward.1} parent=1 // pred_check
      _
    $region79: #{critic_forward.1} parent=1 // pred_check_branch
      %132 = sbr.rel (0) target = $region81
    $region80: #{critic_forward.1} parent=1 // pred_region
      %134 = dma.done [#allocation12], 16
    $region81: #{critic_forward.1} parent=1 // pred_fallthru
      _
    %v135 = vld [vmem:[#allocation3] sm:$0xff]
    %v136 = vld [vmem:[#allocation7] sm:$0xff]
    %v137 = vld [vmem:[#allocation7 + $0x8] sm:$0xff]
    %v138 = vld [vmem:[%s3] sm:$0x1]
    %v140 = vperm.slane %v138, 0
    %vm142 = vcmask 130048
    %v144 = vsel %vm142, %v135, 0
    %146 = vmatpush.msra.mxu0 0.0
    %147 = vmatpush.msra.mxu0 0.0
    %148 = vmatpush.msra.mxu0 0.0
    %149 = vmatpush.msra.mxu0 0.0
    %150 = vmatpush.msra.mxu0 0.0
    %151 = vmatpush.msra.mxu0 0.0
    %152 = vmatpush.msra.mxu0 0.0
    %153 = vmatpush.msra.mxu0 0.0
    %154 = vmatpush.msra.mxu0 0.0
    %155 = vmatpush.msra.mxu0 0.0
    %156 = vmatpush.msra.mxu0 0.0
    %157 = vmatpush.msra.mxu0 0.0
    %158 = vmatpush.msra.mxu0 0.0
    %159 = vmatpush.msra.mxu0 0.0
    %v160 = vand.u32 %v137, 4294901760
    %161 = vmatpush.msra.mxu0 %v160
    %v162 = vand.u32 %v136, 4294901760
    %163 = vmatpush.msra.mxu0 %v162
    %v164 = vand.u32 %v144, 4294901760
    %v165 = vsub.f32 %v144, %v164
    %v166 = vand.u32 %v165, 4294901760
    %v167 = vsub.f32 %v165, %v166
    %v168 = vand.u32 %v167, 4294901760
    %169 = vmatmul.f32.gmra.mxu0 %v168
    %v170 = vpop.f32.mrf.mxu0
    %v171 = vadd.f32 %v140, %v170
    %172 = vdwg.mxu0
    %173 = vmatpush.msra.mxu0 0.0
    %174 = vmatpush.msra.mxu0 0.0
    %175 = vmatpush.msra.mxu0 0.0
    %176 = vmatpush.msra.mxu0 0.0
    %177 = vmatpush.msra.mxu0 0.0
    %178 = vmatpush.msra.mxu0 0.0
    %179 = vmatpush.msra.mxu0 0.0
    %180 = vmatpush.msra.mxu0 0.0
    %181 = vmatpush.msra.mxu0 0.0
    %182 = vmatpush.msra.mxu0 0.0
    %183 = vmatpush.msra.mxu0 0.0
    %184 = vmatpush.msra.mxu0 0.0
    %185 = vmatpush.msra.mxu0 0.0
    %186 = vmatpush.msra.mxu0 0.0
    %v187 = vand.u32 %v137, 4294901760
    %v188 = vsub.f32 %v137, %v187
    %v189 = vand.u32 %v188, 4294901760
    %v190 = vsub.f32 %v188, %v189
    %v191 = vand.u32 %v190, 4294901760
    %192 = vmatpush.msra.mxu0 %v191
    %v193 = vand.u32 %v136, 4294901760
    %v194 = vsub.f32 %v136, %v193
    %v195 = vand.u32 %v194, 4294901760
    %v196 = vsub.f32 %v194, %v195
    %v197 = vand.u32 %v196, 4294901760
    %198 = vmatpush.msra.mxu0 %v197
    %v199 = vand.u32 %v144, 4294901760
    %200 = vmatmul.f32.gmra.mxu0 %v199
    %v201 = vpop.f32.mrf.mxu0
    %v202 = vadd.f32 %v171, %v201
    %203 = vdwg.mxu0
    %204 = vmatpush.msra.mxu0 0.0
    %205 = vmatpush.msra.mxu0 0.0
    %206 = vmatpush.msra.mxu0 0.0
    %207 = vmatpush.msra.mxu0 0.0
    %208 = vmatpush.msra.mxu0 0.0
    %209 = vmatpush.msra.mxu0 0.0
    %210 = vmatpush.msra.mxu0 0.0
    %211 = vmatpush.msra.mxu0 0.0
    %212 = vmatpush.msra.mxu0 0.0
    %213 = vmatpush.msra.mxu0 0.0
    %214 = vmatpush.msra.mxu0 0.0
    %215 = vmatpush.msra.mxu0 0.0
    %216 = vmatpush.msra.mxu0 0.0
    %217 = vmatpush.msra.mxu0 0.0
    %v218 = vand.u32 %v137, 4294901760
    %v219 = vsub.f32 %v137, %v218
    %220 = vmatpush.msra.mxu0 %v219
    %v221 = vand.u32 %v136, 4294901760
    %v222 = vsub.f32 %v136, %v221
    %223 = vmatpush.msra.mxu0 %v222
    %v224 = vand.u32 %v144, 4294901760
    %v225 = vsub.f32 %v144, %v224
    %226 = vmatmul.f32.gmra.mxu0 %v225
    %v227 = vpop.f32.mrf.mxu0
    %v228 = vadd.f32 %v202, %v227
    %229 = vdwg.mxu0
    %230 = vmatpush.msra.mxu0 0.0
    %231 = vmatpush.msra.mxu0 0.0
    %232 = vmatpush.msra.mxu0 0.0
    %233 = vmatpush.msra.mxu0 0.0
    %234 = vmatpush.msra.mxu0 0.0
    %235 = vmatpush.msra.mxu0 0.0
    %236 = vmatpush.msra.mxu0 0.0
    %237 = vmatpush.msra.mxu0 0.0
    %238 = vmatpush.msra.mxu0 0.0
    %239 = vmatpush.msra.mxu0 0.0
    %240 = vmatpush.msra.mxu0 0.0
    %241 = vmatpush.msra.mxu0 0.0
    %242 = vmatpush.msra.mxu0 0.0
    %243 = vmatpush.msra.mxu0 0.0
    %v244 = vand.u32 %v137, 4294901760
    %245 = vmatpush.msra.mxu0 %v244
    %v246 = vand.u32 %v136, 4294901760
    %247 = vmatpush.msra.mxu0 %v246
    %v248 = vand.u32 %v144, 4294901760
    %v249 = vsub.f32 %v144, %v248
    %v250 = vand.u32 %v249, 4294901760
    %251 = vmatmul.f32.gmra.mxu0 %v250
    %v252 = vpop.f32.mrf.mxu0
    %v253 = vadd.f32 %v228, %v252
    %254 = vdwg.mxu0
    %255 = vmatpush.msra.mxu0 0.0
    %256 = vmatpush.msra.mxu0 0.0
    %257 = vmatpush.msra.mxu0 0.0
    %258 = vmatpush.msra.mxu0 0.0
    %259 = vmatpush.msra.mxu0 0.0
    %260 = vmatpush.msra.mxu0 0.0
    %261 = vmatpush.msra.mxu0 0.0
    %262 = vmatpush.msra.mxu0 0.0
    %263 = vmatpush.msra.mxu0 0.0
    %264 = vmatpush.msra.mxu0 0.0
    %265 = vmatpush.msra.mxu0 0.0
    %266 = vmatpush.msra.mxu0 0.0
    %267 = vmatpush.msra.mxu0 0.0
    %268 = vmatpush.msra.mxu0 0.0
    %v269 = vand.u32 %v137, 4294901760
    %v270 = vsub.f32 %v137, %v269
    %v271 = vand.u32 %v270, 4294901760
    %272 = vmatpush.msra.mxu0 %v271
    %v273 = vand.u32 %v136, 4294901760
    %v274 = vsub.f32 %v136, %v273
    %v275 = vand.u32 %v274, 4294901760
    %276 = vmatpush.msra.mxu0 %v275
    %v277 = vand.u32 %v144, 4294901760
    %278 = vmatmul.f32.gmra.mxu0 %v277
    %v279 = vpop.f32.mrf.mxu0
    %v280 = vadd.f32 %v253, %v279
    %281 = vdwg.mxu0
    %282 = vmatpush.msra.mxu0 0.0
    %283 = vmatpush.msra.mxu0 0.0
    %284 = vmatpush.msra.mxu0 0.0
    %285 = vmatpush.msra.mxu0 0.0
    %286 = vmatpush.msra.mxu0 0.0
    %287 = vmatpush.msra.mxu0 0.0
    %288 = vmatpush.msra.mxu0 0.0
    %289 = vmatpush.msra.mxu0 0.0
    %290 = vmatpush.msra.mxu0 0.0
    %291 = vmatpush.msra.mxu0 0.0
    %292 = vmatpush.msra.mxu0 0.0
    %293 = vmatpush.msra.mxu0 0.0
    %294 = vmatpush.msra.mxu0 0.0
    %295 = vmatpush.msra.mxu0 0.0
    %v296 = vand.u32 %v137, 4294901760
    %297 = vmatpush.msra.mxu0 %v296
    %v298 = vand.u32 %v136, 4294901760
    %299 = vmatpush.msra.mxu0 %v298
    %v300 = vand.u32 %v144, 4294901760
    %301 = vmatmul.f32.gmra.mxu0 %v300
    %v302 = vpop.f32.mrf.mxu0
    %v303 = vadd.f32 %v280, %v302
    %304 = vdwg.mxu0
    %v305 = vld [vmem:[%s4] sm:$0x1]
    %v306 = vld [vmem:[%s5] sm:$0x1]
    %307 = vadd.xlane.f32.xlu0 %v303
    %v308 = vpop.xlane.xlu0 %307
    %v309 = vmul.f32 %v303, %v303
    %310 = vadd.xlane.f32.xlu0 %v309
    %v311 = vpop.xlane.xlu0 %310
    %v312 = vmul.f32 %v308, 0.0078125
    %v313 = vmul.f32 %v311, 0.0078125
    %v314 = vmul.f32 %v312, %v312
    %v315 = vsub.f32 %v313, %v314
    %v316 = vmax.f32 %v315, 0.0
    %v317 = vadd.f32 %v316, 1e-05
    %v318 = vrsqrt.pop %v317
    %v319 = vmul.f32 %v318, %v317
    %v320 = vmul.f32 %v319, %v318
    %v321 = vmul.f32 0.5, %v320
    %v322 = vsub.f32 1.5, %v321
    %v323 = vmul.f32 %v318, %v322
    %vm324 = vweird.f32 %v317
    %vm325 = vweird.f32 %v318
    %vm326 = vmor %vm324, %vm325
    %v327 = vsel %vm326, %v318, %v323
    %v329 = vperm.slane %v305, 0
    %v331 = vmul.f32 %v329, %v327
    %v332 = vmul.f32 %v303, %v331
    %v333 = vmul.f32 %v312, %v331
    %v335 = vperm.slane %v306, 0
    %v337 = vsub.f32 %v335, %v333
    %v338 = vadd.f32 %v332, %v337
    %v339 = vmax.f32 %v338, 0.0
    %v340 = vld [vmem:[#allocation8] sm:$0xff]
    %v341 = vld [vmem:[#allocation8 + $0x8] sm:$0xff]
    %v342 = vld [vmem:[#allocation8 + $0x10] sm:$0xff]
    %v343 = vld [vmem:[#allocation8 + $0x18] sm:$0xff]
    %v344 = vld [vmem:[#allocation8 + $0x20] sm:$0xff]
    %v345 = vld [vmem:[#allocation8 + $0x28] sm:$0xff]
    %v346 = vld [vmem:[#allocation8 + $0x30] sm:$0xff]
    %v347 = vld [vmem:[#allocation8 + $0x38] sm:$0xff]
    %v348 = vld [vmem:[#allocation8 + $0x40] sm:$0xff]
    %v349 = vld [vmem:[#allocation8 + $0x48] sm:$0xff]
    %v350 = vld [vmem:[#allocation8 + $0x50] sm:$0xff]
    %v351 = vld [vmem:[#allocation8 + $0x58] sm:$0xff]
    %v352 = vld [vmem:[#allocation8 + $0x60] sm:$0xff]
    %v353 = vld [vmem:[#allocation8 + $0x68] sm:$0xff]
    %v354 = vld [vmem:[#allocation8 + $0x70] sm:$0xff]
    %v355 = vld [vmem:[#allocation8 + $0x78] sm:$0xff]
    %v356 = vld [vmem:[%s7] sm:$0x1]
    %v358 = vperm.slane %v356, 0
    %v360 = vand.u32 %v355, 4294901760
    %361 = vmatpush.msra.mxu0 %v360
    %v362 = vand.u32 %v354, 4294901760
    %363 = vmatpush.msra.mxu0 %v362
    %v364 = vand.u32 %v353, 4294901760
    %365 = vmatpush.msra.mxu0 %v364
    %v366 = vand.u32 %v352, 4294901760
    %367 = vmatpush.msra.mxu0 %v366
    %v368 = vand.u32 %v351, 4294901760
    %369 = vmatpush.msra.mxu0 %v368
    %v370 = vand.u32 %v350, 4294901760
    %371 = vmatpush.msra.mxu0 %v370
    %v372 = vand.u32 %v349, 4294901760
    %373 = vmatpush.msra.mxu0 %v372
    %v374 = vand.u32 %v348, 4294901760
    %375 = vmatpush.msra.mxu0 %v374
    %v376 = vand.u32 %v347, 4294901760
    %377 = vmatpush.msra.mxu0 %v376
    %v378 = vand.u32 %v346, 4294901760
    %379 = vmatpush.msra.mxu0 %v378
    %v380 = vand.u32 %v345, 4294901760
    %381 = vmatpush.msra.mxu0 %v380
    %v382 = vand.u32 %v344, 4294901760
    %383 = vmatpush.msra.mxu0 %v382
    %v384 = vand.u32 %v343, 4294901760
    %385 = vmatpush.msra.mxu0 %v384
    %v386 = vand.u32 %v342, 4294901760
    %387 = vmatpush.msra.mxu0 %v386
    %v388 = vand.u32 %v341, 4294901760
    %389 = vmatpush.msra.mxu0 %v388
    %v390 = vand.u32 %v340, 4294901760
    %391 = vmatpush.msra.mxu0 %v390
    %v392 = vand.u32 %v339, 4294901760
    %v393 = vsub.f32 %v339, %v392
    %v394 = vand.u32 %v393, 4294901760
    %v395 = vsub.f32 %v393, %v394
    %v396 = vand.u32 %v395, 4294901760
    %397 = vmatmul.f32.gmra.mxu0 %v396
    %v398 = vpop.f32.mrf.mxu0
    %v399 = vadd.f32 %v358, %v398
    %400 = vdwg.mxu0
    %v401 = vand.u32 %v355, 4294901760
    %v402 = vsub.f32 %v355, %v401
    %v403 = vand.u32 %v402, 4294901760
    %v404 = vsub.f32 %v402, %v403
    %v405 = vand.u32 %v404, 4294901760
    %406 = vmatpush.msra.mxu0 %v405
    %v407 = vand.u32 %v354, 4294901760
    %v408 = vsub.f32 %v354, %v407
    %v409 = vand.u32 %v408, 4294901760
    %v410 = vsub.f32 %v408, %v409
    %v411 = vand.u32 %v410, 4294901760
    %412 = vmatpush.msra.mxu0 %v411
    %v413 = vand.u32 %v353, 4294901760
    %v414 = vsub.f32 %v353, %v413
    %v415 = vand.u32 %v414, 4294901760
    %v416 = vsub.f32 %v414, %v415
    %v417 = vand.u32 %v416, 4294901760
    %418 = vmatpush.msra.mxu0 %v417
    %v419 = vand.u32 %v352, 4294901760
    %v420 = vsub.f32 %v352, %v419
    %v421 = vand.u32 %v420, 4294901760
    %v422 = vsub.f32 %v420, %v421
    %v423 = vand.u32 %v422, 4294901760
    %424 = vmatpush.msra.mxu0 %v423
    %v425 = vand.u32 %v351, 4294901760
    %v426 = vsub.f32 %v351, %v425
    %v427 = vand.u32 %v426, 4294901760
    %v428 = vsub.f32 %v426, %v427
    %v429 = vand.u32 %v428, 4294901760
    %430 = vmatpush.msra.mxu0 %v429
    %v431 = vand.u32 %v350, 4294901760
    %v432 = vsub.f32 %v350, %v431
    %v433 = vand.u32 %v432, 4294901760
    %v434 = vsub.f32 %v432, %v433
    %v435 = vand.u32 %v434, 4294901760
    %436 = vmatpush.msra.mxu0 %v435
    %v437 = vand.u32 %v349, 4294901760
    %v438 = vsub.f32 %v349, %v437
    %v439 = vand.u32 %v438, 4294901760
    %v440 = vsub.f32 %v438, %v439
    %v441 = vand.u32 %v440, 4294901760
    %442 = vmatpush.msra.mxu0 %v441
    %v443 = vand.u32 %v348, 4294901760
    %v444 = vsub.f32 %v348, %v443
    %v445 = vand.u32 %v444, 4294901760
    %v446 = vsub.f32 %v444, %v445
    %v447 = vand.u32 %v446, 4294901760
    %448 = vmatpush.msra.mxu0 %v447
    %v449 = vand.u32 %v347, 4294901760
    %v450 = vsub.f32 %v347, %v449
    %v451 = vand.u32 %v450, 4294901760
    %v452 = vsub.f32 %v450, %v451
    %v453 = vand.u32 %v452, 4294901760
    %454 = vmatpush.msra.mxu0 %v453
    %v455 = vand.u32 %v346, 4294901760
    %v456 = vsub.f32 %v346, %v455
    %v457 = vand.u32 %v456, 4294901760
    %v458 = vsub.f32 %v456, %v457
    %v459 = vand.u32 %v458, 4294901760
    %460 = vmatpush.msra.mxu0 %v459
    %v461 = vand.u32 %v345, 4294901760
    %v462 = vsub.f32 %v345, %v461
    %v463 = vand.u32 %v462, 4294901760
    %v464 = vsub.f32 %v462, %v463
    %v465 = vand.u32 %v464, 4294901760
    %466 = vmatpush.msra.mxu0 %v465
    %v467 = vand.u32 %v344, 4294901760
    %v468 = vsub.f32 %v344, %v467
    %v469 = vand.u32 %v468, 4294901760
    %v470 = vsub.f32 %v468, %v469
    %v471 = vand.u32 %v470, 4294901760
    %472 = vmatpush.msra.mxu0 %v471
    %v473 = vand.u32 %v343, 4294901760
    %v474 = vsub.f32 %v343, %v473
    %v475 = vand.u32 %v474, 4294901760
    %v476 = vsub.f32 %v474, %v475
    %v477 = vand.u32 %v476, 4294901760
    %478 = vmatpush.msra.mxu0 %v477
    %v479 = vand.u32 %v342, 4294901760
    %v480 = vsub.f32 %v342, %v479
    %v481 = vand.u32 %v480, 4294901760
    %v482 = vsub.f32 %v480, %v481
    %v483 = vand.u32 %v482, 4294901760
    %484 = vmatpush.msra.mxu0 %v483
    %v485 = vand.u32 %v341, 4294901760
    %v486 = vsub.f32 %v341, %v485
    %v487 = vand.u32 %v486, 4294901760
    %v488 = vsub.f32 %v486, %v487
    %v489 = vand.u32 %v488, 4294901760
    %490 = vmatpush.msra.mxu0 %v489
    %v491 = vand.u32 %v340, 4294901760
    %v492 = vsub.f32 %v340, %v491
    %v493 = vand.u32 %v492, 4294901760
    %v494 = vsub.f32 %v492, %v493
    %v495 = vand.u32 %v494, 4294901760
    %496 = vmatpush.msra.mxu0 %v495
    %v497 = vand.u32 %v339, 4294901760
    %498 = vmatmul.f32.gmra.mxu0 %v497
    %v499 = vpop.f32.mrf.mxu0
    %v500 = vadd.f32 %v399, %v499
    %501 = vdwg.mxu0
    %v502 = vand.u32 %v355, 4294901760
    %v503 = vsub.f32 %v355, %v502
    %504 = vmatpush.msra.mxu0 %v503
    %v505 = vand.u32 %v354, 4294901760
    %v506 = vsub.f32 %v354, %v505
    %507 = vmatpush.msra.mxu0 %v506
    %v508 = vand.u32 %v353, 4294901760
    %v509 = vsub.f32 %v353, %v508
    %510 = vmatpush.msra.mxu0 %v509
    %v511 = vand.u32 %v352, 4294901760
    %v512 = vsub.f32 %v352, %v511
    %513 = vmatpush.msra.mxu0 %v512
    %v514 = vand.u32 %v351, 4294901760
    %v515 = vsub.f32 %v351, %v514
    %516 = vmatpush.msra.mxu0 %v515
    %v517 = vand.u32 %v350, 4294901760
    %v518 = vsub.f32 %v350, %v517
    %519 = vmatpush.msra.mxu0 %v518
    %v520 = vand.u32 %v349, 4294901760
    %v521 = vsub.f32 %v349, %v520
    %522 = vmatpush.msra.mxu0 %v521
    %v523 = vand.u32 %v348, 4294901760
    %v524 = vsub.f32 %v348, %v523
    %525 = vmatpush.msra.mxu0 %v524
    %v526 = vand.u32 %v347, 4294901760
    %v527 = vsub.f32 %v347, %v526
    %528 = vmatpush.msra.mxu0 %v527
    %v529 = vand.u32 %v346, 4294901760
    %v530 = vsub.f32 %v346, %v529
    %531 = vmatpush.msra.mxu0 %v530
    %v532 = vand.u32 %v345, 4294901760
    %v533 = vsub.f32 %v345, %v532
    %534 = vmatpush.msra.mxu0 %v533
    %v535 = vand.u32 %v344, 4294901760
    %v536 = vsub.f32 %v344, %v535
    %537 = vmatpush.msra.mxu0 %v536
    %v538 = vand.u32 %v343, 4294901760
    %v539 = vsub.f32 %v343, %v538
    %540 = vmatpush.msra.mxu0 %v539
    %v541 = vand.u32 %v342, 4294901760
    %v542 = vsub.f32 %v342, %v541
    %543 = vmatpush.msra.mxu0 %v542
    %v544 = vand.u32 %v341, 4294901760
    %v545 = vsub.f32 %v341, %v544
    %546 = vmatpush.msra.mxu0 %v545
    %v547 = vand.u32 %v340, 4294901760
    %v548 = vsub.f32 %v340, %v547
    %549 = vmatpush.msra.mxu0 %v548
    %v550 = vand.u32 %v339, 4294901760
    %v551 = vsub.f32 %v339, %v550
    %552 = vmatmul.f32.gmra.mxu0 %v551
    %v553 = vpop.f32.mrf.mxu0
    %v554 = vadd.f32 %v500, %v553
    %555 = vdwg.mxu0
    %v556 = vand.u32 %v355, 4294901760
    %557 = vmatpush.msra.mxu0 %v556
    %v558 = vand.u32 %v354, 4294901760
    %559 = vmatpush.msra.mxu0 %v558
    %v560 = vand.u32 %v353, 4294901760
    %561 = vmatpush.msra.mxu0 %v560
    %v562 = vand.u32 %v352, 4294901760
    %563 = vmatpush.msra.mxu0 %v562
    %v564 = vand.u32 %v351, 4294901760
    %565 = vmatpush.msra.mxu0 %v564
    %v566 = vand.u32 %v350, 4294901760
    %567 = vmatpush.msra.mxu0 %v566
    %v568 = vand.u32 %v349, 4294901760
    %569 = vmatpush.msra.mxu0 %v568
    %v570 = vand.u32 %v348, 4294901760
    %571 = vmatpush.msra.mxu0 %v570
    %v572 = vand.u32 %v347, 4294901760
    %573 = vmatpush.msra.mxu0 %v572
    %v574 = vand.u32 %v346, 4294901760
    %575 = vmatpush.msra.mxu0 %v574
    %v576 = vand.u32 %v345, 4294901760
    %577 = vmatpush.msra.mxu0 %v576
    %v578 = vand.u32 %v344, 4294901760
    %579 = vmatpush.msra.mxu0 %v578
    %v580 = vand.u32 %v343, 4294901760
    %581 = vmatpush.msra.mxu0 %v580
    %v582 = vand.u32 %v342, 4294901760
    %583 = vmatpush.msra.mxu0 %v582
    %v584 = vand.u32 %v341, 4294901760
    %585 = vmatpush.msra.mxu0 %v584
    %v586 = vand.u32 %v340, 4294901760
    %587 = vmatpush.msra.mxu0 %v586
    %v588 = vand.u32 %v339, 4294901760
    %v589 = vsub.f32 %v339, %v588
    %v590 = vand.u32 %v589, 4294901760
    %591 = vmatmul.f32.gmra.mxu0 %v590
    %v592 = vpop.f32.mrf.mxu0
    %v593 = vadd.f32 %v554, %v592
    %594 = vdwg.mxu0
    %v595 = vand.u32 %v355, 4294901760
    %v596 = vsub.f32 %v355, %v595
    %v597 = vand.u32 %v596, 4294901760
    %598 = vmatpush.msra.mxu0 %v597
    %v599 = vand.u32 %v354, 4294901760
    %v600 = vsub.f32 %v354, %v599
    %v601 = vand.u32 %v600, 4294901760
    %602 = vmatpush.msra.mxu0 %v601
    %v603 = vand.u32 %v353, 4294901760
    %v604 = vsub.f32 %v353, %v603
    %v605 = vand.u32 %v604, 4294901760
    %606 = vmatpush.msra.mxu0 %v605
    %v607 = vand.u32 %v352, 4294901760
    %v608 = vsub.f32 %v352, %v607
    %v609 = vand.u32 %v608, 4294901760
    %610 = vmatpush.msra.mxu0 %v609
    %v611 = vand.u32 %v351, 4294901760
    %v612 = vsub.f32 %v351, %v611
    %v613 = vand.u32 %v612, 4294901760
    %614 = vmatpush.msra.mxu0 %v613
    %v615 = vand.u32 %v350, 4294901760
    %v616 = vsub.f32 %v350, %v615
    %v617 = vand.u32 %v616, 4294901760
    %618 = vmatpush.msra.mxu0 %v617
    %v619 = vand.u32 %v349, 4294901760
    %v620 = vsub.f32 %v349, %v619
    %v621 = vand.u32 %v620, 4294901760
    %622 = vmatpush.msra.mxu0 %v621
    %v623 = vand.u32 %v348, 4294901760
    %v624 = vsub.f32 %v348, %v623
    %v625 = vand.u32 %v624, 4294901760
    %626 = vmatpush.msra.mxu0 %v625
    %v627 = vand.u32 %v347, 4294901760
    %v628 = vsub.f32 %v347, %v627
    %v629 = vand.u32 %v628, 4294901760
    %630 = vmatpush.msra.mxu0 %v629
    %v631 = vand.u32 %v346, 4294901760
    %v632 = vsub.f32 %v346, %v631
    %v633 = vand.u32 %v632, 4294901760
    %634 = vmatpush.msra.mxu0 %v633
    %v635 = vand.u32 %v345, 4294901760
    %v636 = vsub.f32 %v345, %v635
    %v637 = vand.u32 %v636, 4294901760
    %638 = vmatpush.msra.mxu0 %v637
    %v639 = vand.u32 %v344, 4294901760
    %v640 = vsub.f32 %v344, %v639
    %v641 = vand.u32 %v640, 4294901760
    %642 = vmatpush.msra.mxu0 %v641
    %v643 = vand.u32 %v343, 4294901760
    %v644 = vsub.f32 %v343, %v643
    %v645 = vand.u32 %v644, 4294901760
    %646 = vmatpush.msra.mxu0 %v645
    %v647 = vand.u32 %v342, 4294901760
    %v648 = vsub.f32 %v342, %v647
    %v649 = vand.u32 %v648, 4294901760
    %650 = vmatpush.msra.mxu0 %v649
    %v651 = vand.u32 %v341, 4294901760
    %v652 = vsub.f32 %v341, %v651
    %v653 = vand.u32 %v652, 4294901760
    %654 = vmatpush.msra.mxu0 %v653
    %v655 = vand.u32 %v340, 4294901760
    %v656 = vsub.f32 %v340, %v655
    %v657 = vand.u32 %v656, 4294901760
    %658 = vmatpush.msra.mxu0 %v657
    %v659 = vand.u32 %v339, 4294901760
    %660 = vmatmul.f32.gmra.mxu0 %v659
    %v661 = vpop.f32.mrf.mxu0
    %v662 = vadd.f32 %v593, %v661
    %663 = vdwg.mxu0
    %v664 = vand.u32 %v355, 4294901760
    %665 = vmatpush.msra.mxu0 %v664
    %v666 = vand.u32 %v354, 4294901760
    %667 = vmatpush.msra.mxu0 %v666
    %v668 = vand.u32 %v353, 4294901760
    %669 = vmatpush.msra.mxu0 %v668
    %v670 = vand.u32 %v352, 4294901760
    %671 = vmatpush.msra.mxu0 %v670
    %v672 = vand.u32 %v351, 4294901760
    %673 = vmatpush.msra.mxu0 %v672
    %v674 = vand.u32 %v350, 4294901760
    %675 = vmatpush.msra.mxu0 %v674
    %v676 = vand.u32 %v349, 4294901760
    %677 = vmatpush.msra.mxu0 %v676
    %v678 = vand.u32 %v348, 4294901760
    %679 = vmatpush.msra.mxu0 %v678
    %v680 = vand.u32 %v347, 4294901760
    %681 = vmatpush.msra.mxu0 %v680
    %v682 = vand.u32 %v346, 4294901760
    %683 = vmatpush.msra.mxu0 %v682
    %v684 = vand.u32 %v345, 4294901760
    %685 = vmatpush.msra.mxu0 %v684
    %v686 = vand.u32 %v344, 4294901760
    %687 = vmatpush.msra.mxu0 %v686
    %v688 = vand.u32 %v343, 4294901760
    %689 = vmatpush.msra.mxu0 %v688
    %v690 = vand.u32 %v342, 4294901760
    %691 = vmatpush.msra.mxu0 %v690
    %v692 = vand.u32 %v341, 4294901760
    %693 = vmatpush.msra.mxu0 %v692
    %v694 = vand.u32 %v340, 4294901760
    %695 = vmatpush.msra.mxu0 %v694
    %v696 = vand.u32 %v339, 4294901760
    %697 = vmatmul.f32.gmra.mxu0 %v696
    %v698 = vpop.f32.mrf.mxu0
    %v699 = vadd.f32 %v662, %v698
    %700 = vdwg.mxu0
    %v701 = vld [vmem:[#allocation10] sm:$0x1]
    %v702 = vld [vmem:[#allocation11] sm:$0x1]
    %703 = vadd.xlane.f32.xlu0 %v699
    %v704 = vpop.xlane.xlu0 %703
    %v705 = vmul.f32 %v699, %v699
    %706 = vadd.xlane.f32.xlu0 %v705
    %v707 = vpop.xlane.xlu0 %706
    %v708 = vmul.f32 %v704, 0.0078125
    %v709 = vmul.f32 %v707, 0.0078125
    %v710 = vmul.f32 %v708, %v708
    %v711 = vsub.f32 %v709, %v710
    %v712 = vmax.f32 %v711, 0.0
    %v713 = vadd.f32 %v712, 1e-05
    %v714 = vrsqrt.pop %v713
    %v715 = vmul.f32 %v714, %v713
    %v716 = vmul.f32 %v715, %v714
    %v717 = vmul.f32 0.5, %v716
    %v718 = vsub.f32 1.5, %v717
    %v719 = vmul.f32 %v714, %v718
    %vm720 = vweird.f32 %v713
    %vm721 = vweird.f32 %v714
    %vm722 = vmor %vm720, %vm721
    %v723 = vsel %vm722, %v714, %v719
    %v725 = vperm.slane %v701, 0
    %v727 = vmul.f32 %v725, %v723
    %v728 = vmul.f32 %v699, %v727
    %v729 = vmul.f32 %v708, %v727
    %v731 = vperm.slane %v702, 0
    %v733 = vsub.f32 %v731, %v729
    %v734 = vadd.f32 %v728, %v733
    %v735 = vld [vmem:[#allocation5] sm:$0xff]
    %v736 = vld [vmem:[%s10] sm:$0xff]
    %v737 = vld [vmem:[%s11] sm:$0x1]
    %v739 = vperm.slane %v737, 0
    %vm741 = vcmask 64512
    %v743 = vsel %vm741, %v735, 0
    %745 = vmatpush.msra.mxu0 0.0
    %746 = vmatpush.msra.mxu0 0.0
    %747 = vmatpush.msra.mxu0 0.0
    %748 = vmatpush.msra.mxu0 0.0
    %749 = vmatpush.msra.mxu0 0.0
    %750 = vmatpush.msra.mxu0 0.0
    %751 = vmatpush.msra.mxu0 0.0
    %752 = vmatpush.msra.mxu0 0.0
    %753 = vmatpush.msra.mxu0 0.0
    %754 = vmatpush.msra.mxu0 0.0
    %755 = vmatpush.msra.mxu0 0.0
    %756 = vmatpush.msra.mxu0 0.0
    %757 = vmatpush.msra.mxu0 0.0
    %758 = vmatpush.msra.mxu0 0.0
    %759 = vmatpush.msra.mxu0 0.0
    %v760 = vand.u32 %v736, 4294901760
    %761 = vmatpush.msra.mxu0 %v760
    %v762 = vand.u32 %v743, 4294901760
    %v763 = vsub.f32 %v743, %v762
    %v764 = vand.u32 %v763, 4294901760
    %v765 = vsub.f32 %v763, %v764
    %v766 = vand.u32 %v765, 4294901760
    %767 = vmatmul.f32.gmra.mxu0 %v766
    %v768 = vpop.f32.mrf.mxu0
    %v769 = vadd.f32 %v739, %v768
    %770 = vdwg.mxu0
    %771 = vmatpush.msra.mxu0 0.0
    %772 = vmatpush.msra.mxu0 0.0
    %773 = vmatpush.msra.mxu0 0.0
    %774 = vmatpush.msra.mxu0 0.0
    %775 = vmatpush.msra.mxu0 0.0
    %776 = vmatpush.msra.mxu0 0.0
    %777 = vmatpush.msra.mxu0 0.0
    %778 = vmatpush.msra.mxu0 0.0
    %779 = vmatpush.msra.mxu0 0.0
    %780 = vmatpush.msra.mxu0 0.0
    %781 = vmatpush.msra.mxu0 0.0
    %782 = vmatpush.msra.mxu0 0.0
    %783 = vmatpush.msra.mxu0 0.0
    %784 = vmatpush.msra.mxu0 0.0
    %785 = vmatpush.msra.mxu0 0.0
    %v786 = vand.u32 %v736, 4294901760
    %v787 = vsub.f32 %v736, %v786
    %v788 = vand.u32 %v787, 4294901760
    %v789 = vsub.f32 %v787, %v788
    %v790 = vand.u32 %v789, 4294901760
    %791 = vmatpush.msra.mxu0 %v790
    %v792 = vand.u32 %v743, 4294901760
    %793 = vmatmul.f32.gmra.mxu0 %v792
    %v794 = vpop.f32.mrf.mxu0
    %v795 = vadd.f32 %v769, %v794
    %796 = vdwg.mxu0
    %797 = vmatpush.msra.mxu0 0.0
    %798 = vmatpush.msra.mxu0 0.0
    %799 = vmatpush.msra.mxu0 0.0
    %800 = vmatpush.msra.mxu0 0.0
    %801 = vmatpush.msra.mxu0 0.0
    %802 = vmatpush.msra.mxu0 0.0
    %803 = vmatpush.msra.mxu0 0.0
    %804 = vmatpush.msra.mxu0 0.0
    %805 = vmatpush.msra.mxu0 0.0
    %806 = vmatpush.msra.mxu0 0.0
    %807 = vmatpush.msra.mxu0 0.0
    %808 = vmatpush.msra.mxu0 0.0
    %809 = vmatpush.msra.mxu0 0.0
    %810 = vmatpush.msra.mxu0 0.0
    %811 = vmatpush.msra.mxu0 0.0
    %v812 = vand.u32 %v736, 4294901760
    %v813 = vsub.f32 %v736, %v812
    %814 = vmatpush.msra.mxu0 %v813
    %v815 = vand.u32 %v743, 4294901760
    %v816 = vsub.f32 %v743, %v815
    %817 = vmatmul.f32.gmra.mxu0 %v816
    %v818 = vpop.f32.mrf.mxu0
    %v819 = vadd.f32 %v795, %v818
    %820 = vdwg.mxu0
    %821 = vmatpush.msra.mxu0 0.0
    %822 = vmatpush.msra.mxu0 0.0
    %823 = vmatpush.msra.mxu0 0.0
    %824 = vmatpush.msra.mxu0 0.0
    %825 = vmatpush.msra.mxu0 0.0
    %826 = vmatpush.msra.mxu0 0.0
    %827 = vmatpush.msra.mxu0 0.0
    %828 = vmatpush.msra.mxu0 0.0
    %829 = vmatpush.msra.mxu0 0.0
    %830 = vmatpush.msra.mxu0 0.0
    %831 = vmatpush.msra.mxu0 0.0
    %832 = vmatpush.msra.mxu0 0.0
    %833 = vmatpush.msra.mxu0 0.0
    %834 = vmatpush.msra.mxu0 0.0
    %835 = vmatpush.msra.mxu0 0.0
    %v836 = vand.u32 %v736, 4294901760
    %837 = vmatpush.msra.mxu0 %v836
    %v838 = vand.u32 %v743, 4294901760
    %v839 = vsub.f32 %v743, %v838
    %v840 = vand.u32 %v839, 4294901760
    %841 = vmatmul.f32.gmra.mxu0 %v840
    %v842 = vpop.f32.mrf.mxu0
    %v843 = vadd.f32 %v819, %v842
    %844 = vdwg.mxu0
    %845 = vmatpush.msra.mxu0 0.0
    %846 = vmatpush.msra.mxu0 0.0
    %847 = vmatpush.msra.mxu0 0.0
    %848 = vmatpush.msra.mxu0 0.0
    %849 = vmatpush.msra.mxu0 0.0
    %850 = vmatpush.msra.mxu0 0.0
    %851 = vmatpush.msra.mxu0 0.0
    %852 = vmatpush.msra.mxu0 0.0
    %853 = vmatpush.msra.mxu0 0.0
    %854 = vmatpush.msra.mxu0 0.0
    %855 = vmatpush.msra.mxu0 0.0
    %856 = vmatpush.msra.mxu0 0.0
    %857 = vmatpush.msra.mxu0 0.0
    %858 = vmatpush.msra.mxu0 0.0
    %859 = vmatpush.msra.mxu0 0.0
    %v860 = vand.u32 %v736, 4294901760
    %v861 = vsub.f32 %v736, %v860
    %v862 = vand.u32 %v861, 4294901760
    %863 = vmatpush.msra.mxu0 %v862
    %v864 = vand.u32 %v743, 4294901760
    %865 = vmatmul.f32.gmra.mxu0 %v864
    %v866 = vpop.f32.mrf.mxu0
    %v867 = vadd.f32 %v843, %v866
    %868 = vdwg.mxu0
    %869 = vmatpush.msra.mxu0 0.0
    %870 = vmatpush.msra.mxu0 0.0
    %871 = vmatpush.msra.mxu0 0.0
    %872 = vmatpush.msra.mxu0 0.0
    %873 = vmatpush.msra.mxu0 0.0
    %874 = vmatpush.msra.mxu0 0.0
    %875 = vmatpush.msra.mxu0 0.0
    %876 = vmatpush.msra.mxu0 0.0
    %877 = vmatpush.msra.mxu0 0.0
    %878 = vmatpush.msra.mxu0 0.0
    %879 = vmatpush.msra.mxu0 0.0
    %880 = vmatpush.msra.mxu0 0.0
    %881 = vmatpush.msra.mxu0 0.0
    %882 = vmatpush.msra.mxu0 0.0
    %883 = vmatpush.msra.mxu0 0.0
    %v884 = vand.u32 %v736, 4294901760
    %885 = vmatpush.msra.mxu0 %v884
    %v886 = vand.u32 %v743, 4294901760
    %887 = vmatmul.f32.gmra.mxu0 %v886
    %v888 = vpop.f32.mrf.mxu0
    %v889 = vadd.f32 %v867, %v888
    %890 = vdwg.mxu0
    %v891 = vmax.f32 %v889, 0.0
    %v892 = vadd.f32 %v734, %v891
    %v893 = vmax.f32 %v892, 0.0
    %v894 = vld [vmem:[%s12] sm:$0x1]
    %v896 = vperm.slane %v894, 0
    %v898 = vmul.f32 %v893, %v896
    %899 = vadd.xlane.f32.xlu0 %v898
    %v900 = vpop.xlane.xlu0 %899
    %v901 = vld [vmem:[#allocation2] sm:$0x1]
    %v903 = vperm.slane %v901, 0
    %v905 = vadd.f32 %v900, %v903
    %vm906 = vcmask 7168
    %907 = vst.msk [vmem:[%s14] sm:$0xff] %vm906, %v905
    // Predicated region
    $region82: #{critic_forward.1} parent=1 // pred_check
      _
    $region83: #{critic_forward.1} parent=1 // pred_check_branch
      %909 = sbr.rel (0) target = $region85
    $region84: #{critic_forward.1} parent=1 // pred_region
      _
    $region85: #{critic_forward.1} parent=1 // pred_fallthru
      _
    // Predicated region
    $region86: #{critic_forward.1} parent=1 // pred_check
      _
    $region87: #{critic_forward.1} parent=1 // pred_check_branch
      %911 = sbr.rel (0) target = $region89
    $region88: #{critic_forward.1} parent=1 // pred_region
      _
    $region89: #{critic_forward.1} parent=1 // pred_fallthru
      _
    %912 = vsyncpa [#allocation4], 1
    %913 = vsyncpa [#allocation6], 1
    %914 = vsyncpa [#allocation9], 1
    %915 = vsyncpa [#allocation12], 1

</llo_original>
